<compile_context>
chip_gen: v5e
topology: v5e:2x2
jax: 0.10.0
libtpu: 0.0.40
codegen_flags: <defaults>
</compile_context>

<pallas_src>
import functools

import numpy as np
import jax
import jax.numpy as jnp
from jax import lax
from jax.experimental import pallas as pl
from jax.experimental.pallas import tpu as pltpu


# ---------------------------------------------------------------------------
# Haar reconstruction filters (pywt.Wavelet('haar').rec_lo / rec_hi)
# ---------------------------------------------------------------------------
_S = np.float32(1.0 / np.sqrt(2.0))
REC_LO = np.array([_S, _S], dtype=np.float32)
REC_HI = np.array([_S, -_S], dtype=np.float32)


def make_idwt_filters():
    # matches torch: w_xy[p, q] = rec_y[p] * rec_x[q]
    w_ll = REC_LO[None, :] * REC_LO[:, None]
    w_lh = REC_LO[None, :] * REC_HI[:, None]
    w_hl = REC_HI[None, :] * REC_LO[:, None]
    w_hh = REC_HI[None, :] * REC_HI[:, None]
    return np.stack([w_ll, w_lh, w_hl, w_hh], axis=0).astype(np.float32)  # (4,2,2)


# ---------------------------------------------------------------------------
# Constant lane-mixing matrices (built once per shape, cached, stored as bf16;
# entries are exactly 0 / +-0.5 so bf16 is lossless)
# ---------------------------------------------------------------------------
def _make_mix_narrow(filters, W, G):
    """(4, G*W, 4*G*W): input lane g*W+j of subband s -> output lane
    g*4W + p*2W + 2j + q, weighted by filters[s, p, q]."""
    f = np.asarray(filters, dtype=np.float32).reshape(4, 2, 2)
    GW = G * W
    M = np.zeros((4, GW, 4 * GW), dtype=np.float32)
    for s in range(4):
        for g in range(G):
            for j in range(W):
                for p in range(2):
                    for q in range(2):
                        M[s, g * W + j, g * 4 * W + p * 2 * W + 2 * j + q] = f[s, p, q]
    return M


def _make_mix_wide(filters, Wt):
    """(2, 4*Wt, 2*Wt): per output-row parity p, K index s*Wt+j -> output lane
    2j + q, weighted by filters[s, p, q]."""
    f = np.asarray(filters, dtype=np.float32).reshape(4, 2, 2)
    M = np.zeros((2, 4 * Wt, 2 * Wt), dtype=np.float32)
    for p in range(2):
        for s in range(4):
            for j in range(Wt):
                for q in range(2):
                    M[p, s * Wt + j, 2 * j + q] = f[s, p, q]
    return M


_MIX_CACHE = {}


def _mix_constant(key, build):
    if key not in _MIX_CACHE:
        _MIX_CACHE[key] = jnp.asarray(build(), dtype=jnp.bfloat16)
    return _MIX_CACHE[key]


# ---------------------------------------------------------------------------
# Hardware budget / block sizing heuristics
# ---------------------------------------------------------------------------
def _hw_budget():
    """(vmem_limit_bytes, per-buffer block target).  Conservative (v7x-safe)
    unless a 128-MiB-VMEM part (v5e / v6e) is positively detected."""
    kind = ""
    try:
        kind = jax.devices()[0].device_kind.lower()
    except Exception:
        pass
    if ("v5" in kind) or ("v6" in kind):
        return 96 * 1024 * 1024, 4 * 1024 * 1024
    return 48 * 1024 * 1024, 2 * 1024 * 1024


def _pick_row_block(rows_total, other_steps, bytes_per_row, target_bytes,
                    override=None):
    if override is not None:
        r = min(rows_total, max(1, int(override)))
        if r < rows_total:
            r = max(8, (r // 8) * 8)          # partial sublane blocks need %8
        return r
    r = min(rows_total, max(8, target_bytes // max(bytes_per_row, 1)))
    if r < rows_total:
        r = max(8, (r // 8) * 8)
    # Keep >= ~8 grid steps so v7x's two TensorCores and the double-buffered
    # DMA pipeline both have work.
    while other_steps * pl.cdiv(rows_total, r) < 8 and r > 8:
        nr = max(8, ((r + 1) // 2 // 8) * 8)
        if nr >= r:
            break
        r = nr
    return r


# ---------------------------------------------------------------------------
# MXU helpers: f32 activations x bf16-exact constant matrix in 2 bf16 passes
# (same accuracy as Precision.HIGH, fewer passes than HIGH/HIGHEST).
# ---------------------------------------------------------------------------
def _bf16_parts(x):
    if x.dtype == jnp.bfloat16:
        return (x,)
    xf = x.astype(jnp.float32)
    hi = xf.astype(jnp.bfloat16)
    lo = (xf - hi.astype(jnp.float32)).astype(jnp.bfloat16)
    return (hi, lo)


def _dot_parts(parts, m):
    acc = jnp.dot(parts[0], m, preferred_element_type=jnp.float32)
    for p in parts[1:]:
        acc = acc + jnp.dot(p, m, preferred_element_type=jnp.float32)
    return acc


# ---------------------------------------------------------------------------
# Kernels
# ---------------------------------------------------------------------------
def _idwt_kernel_fused(m_ref, x_ref, o_ref):
    # x_ref: (1, 4, R, GW), m_ref: (4*GW, 4*GW), o_ref: (1, R, 4*GW)
    # GW % 128 == 0 here, so the lane concat offsets are vreg-aligned.
    x_cat = jnp.concatenate([x_ref[0, s] for s in range(4)], axis=-1)
    y = _dot_parts(_bf16_parts(x_cat), m_ref[...])
    o_ref[0] = y.astype(o_ref.dtype)


def _idwt_kernel_split(m_ref, x_ref, o_ref):
    # x_ref: (1, 4, R, GW), m_ref: (4, GW, 4*GW), o_ref: (1, R, 4*GW)
    acc = _dot_parts(_bf16_parts(x_ref[0, 0]), m_ref[0])
    for s in range(1, 4):
        acc = acc + _dot_parts(_bf16_parts(x_ref[0, s]), m_ref[s])
    o_ref[0] = acc.astype(o_ref.dtype)


def _make_wide_kernel(W, Wt):
    """Column-tiled path for W > 128: bounded K = 4*Wt, bounded mix matrix."""
    ragged = (W % Wt) != 0

    def kernel(m_ref, x_ref, o_ref):
        # x_ref: (1, 4, R, Wt), m_ref: (2, 4*Wt, 2*Wt), o_ref: (1, R, 2, 2*Wt)
        parts4 = [x_ref[0, s] for s in range(4)]
        if ragged:
            # Zero out-of-range lanes of the last column tile (stale VMEM could
            # otherwise leak NaN/Inf through 0*garbage in the dense matmul).
            cb = pl.program_id(2)
            col = lax.broadcasted_iota(jnp.int32, parts4[0].shape, 1) + cb * Wt
            keep = col < W
            parts4 = [jnp.where(keep, v, jnp.zeros_like(v)) for v in parts4]
        x_cat = jnp.concatenate(parts4, axis=-1)          # (R, 4*Wt), aligned
        xp = _bf16_parts(x_cat)
        for p in range(2):                                # output row parity
            y = _dot_parts(xp, m_ref[p])                  # (R, 2*Wt)
            o_ref[0, :, p, :] = y.astype(o_ref.dtype)

    return kernel


# ---------------------------------------------------------------------------
# Wrapper
# ---------------------------------------------------------------------------
def idwt_2d(x, filters, *, block_rows=None, out_dtype=jnp.float32):
    """Inverse 2-D Haar DWT.  x: (B, 4*C, H, W) NCHW -> (B, C, 2H, 2W).

    `filters` must be a concrete (4, 2, 2) array (like the torch registered
    buffer); it is baked into a constant lane-mixing matrix at trace time.
    Call under jax.jit so the reshapes stay layout-only.
    """
    assert x.ndim == 4
    B, C4, H, W = x.shape
    assert C4 % 4 == 0, "channel dim must be a multiple of 4"
    C = C4 // 4
    filters = np.asarray(filters, dtype=np.float32).reshape(4, 2, 2)
    # Haar only: stride == kernel size -> transposed conv has no window overlap.
    # TODO(synk): wavelets with >2 taps need overlapping conv_transpose windows.
    assert filters.shape == (4, 2, 2)

    if x.dtype not in (jnp.float32, jnp.bfloat16):
        x = x.astype(jnp.float32)
    xbytes = jnp.dtype(x.dtype).itemsize
    obytes = jnp.dtype(out_dtype).itemsize

    rows = C * H
    vmem_limit, block_target = _hw_budget()
    fkey = filters.tobytes()

    if W <= 128:
        # ---- narrow path: pack G consecutive (c, i) rows onto the lane axis
        #      so the lane tile is dense and K = N = 4*G*W stays <= 512.
        G = 1
        while (G * 2) * W <= 128 and rows % (G * 2) == 0:
            G *= 2
        GW = G * W
        lanes_out = 4 * GW
        R_in = rows // G

        # free reshape of NCHW (no HBM copy): (B, 4C, H, W) -> (B, 4, rows/G, GW)
        x_view = x.reshape(B, 4, R_in, GW)

        per_row = 4 * GW * xbytes + lanes_out * obytes
        R = _pick_row_block(R_in, B, per_row, block_target, block_rows)
        grid = (B, pl.cdiv(R_in, R))

        fused = (GW % 128 == 0)
        if fused:
            m_arr = _mix_constant(
                ("narrow_fused", W, G, fkey),
                lambda: _make_mix_narrow(filters, W, G).reshape(4 * GW, lanes_out))
            kernel = _idwt_kernel_fused
            m_spec = pl.BlockSpec((4 * GW, lanes_out), lambda b, r: (0, 0))
        else:
            m_arr = _mix_constant(
                ("narrow_split", W, G, fkey),
                lambda: _make_mix_narrow(filters, W, G))
            kernel = _idwt_kernel_split
            m_spec = pl.BlockSpec((4, GW, lanes_out), lambda b, r: (0, 0, 0))

        out = pl.pallas_call(
            kernel,
            out_shape=jax.ShapeDtypeStruct((B, R_in, lanes_out), out_dtype),
            grid_spec=pltpu.PrefetchScalarGridSpec(
                num_scalar_prefetch=0,
                grid=grid,
                in_specs=[
                    m_spec,  # constant (<=512 KiB bf16), fetched once
                    pl.BlockSpec((1, 4, R, GW), lambda b, r: (b, 0, r, 0)),
                ],
                out_specs=pl.BlockSpec((1, R, lanes_out), lambda b, r: (b, r, 0)),
            ),
            compiler_params=pltpu.CompilerParams(
                dimension_semantics=("parallel", "parallel"),
                vmem_limit_bytes=vmem_limit,
            ),
        )(m_arr, x_view)

        # free reshape: (B, rows/G, 4*G*W) is bit-identical to (B, C, 2H, 2W)
        return out.reshape(B, C, 2 * H, 2 * W)

    # ---- wide path (W > 128): column tiles of Wt=128 input columns keep the
    #      contraction (K = 4*Wt) and the mix matrix bounded independent of W.
    Wt = 128
    n_col = pl.cdiv(W, Wt)
    x_view = x.reshape(B, 4, rows, W)                      # free reshape

    # Output view (B, rows, 2, 2W): memory order (r, p, 2j+q) == NCHW.  The
    # size-2 parity dim sits on sublanes (padded to 8 in VMEM); acceptable for
    # this robustness path, which is still HBM-roofline-bound after the fix.
    per_row = 4 * Wt * xbytes + 8 * (2 * Wt) * obytes      # in + padded out
    R = _pick_row_block(rows, B * n_col, per_row, block_target, block_rows)
    grid = (B, pl.cdiv(rows, R), n_col)

    m_arr = _mix_constant(("wide", Wt, fkey), lambda: _make_mix_wide(filters, Wt))

    out = pl.pallas_call(
        _make_wide_kernel(W, Wt),
        out_shape=jax.ShapeDtypeStruct((B, rows, 2, 2 * W), out_dtype),
        grid_spec=pltpu.PrefetchScalarGridSpec(
            num_scalar_prefetch=0,
            grid=grid,
            in_specs=[
                pl.BlockSpec((2, 4 * Wt, 2 * Wt), lambda b, r, c: (0, 0, 0)),
                pl.BlockSpec((1, 4, R, Wt), lambda b, r, c: (b, 0, r, c)),
            ],
            out_specs=pl.BlockSpec((1, R, 2, 2 * Wt), lambda b, r, c: (b, r, 0, c)),
        ),
        compiler_params=pltpu.CompilerParams(
            dimension_semantics=("parallel", "parallel", "parallel"),
            vmem_limit_bytes=vmem_limit,
        ),
    )(m_arr, x_view)

    # free reshape: (B, rows, 2, 2W) is bit-identical to (B, C, 2H, 2W)
    return out.reshape(B, C, 2 * H, 2 * W)


# ---------------------------------------------------------------------------
# Pure-numpy reference of conv_transpose2d(stride=2, groups=C) IDWT semantics
# ---------------------------------------------------------------------------
def idwt_ref_numpy(x, filters):
    x = np.asarray(x, dtype=np.float32)
    B, C4, H, W = x.shape
    C = C4 // 4
    k = filters.shape[-1]
    out = np.zeros((B, C, 2 * (H - 1) + k, 2 * (W - 1) + k), dtype=np.float32)
    xs = x.reshape(B, 4, C, H, W)
    for s in range(4):
        for kh in range(k):
            for kw in range(k):
                out[:, :, kh:kh + 2 * H:2, kw:kw + 2 * W:2] += xs[:, s] * filters[s, kh, kw]
    return out


if __name__ == "__main__":
    filters = make_idwt_filters()                    # (4, 2, 2) Haar recon filters
    run = jax.jit(functools.partial(idwt_2d, filters=filters))
    run_small_blocks = jax.jit(functools.partial(idwt_2d, filters=filters,
                                                 block_rows=8))

    key = jax.random.PRNGKey(0)
    k1, k2, k3 = jax.random.split(key, 3)

    # Case 1: B=2, C=4 output channels (16 input channels), 16x16 spatial.
    # -> narrow fused path (GW = 128), single MXU-friendly lane-mix matmul.
    B, C, H, W = 2, 4, 16, 16
    x1 = jax.random.normal(k1, (B, 4 * C, H, W), dtype=jnp.float32)
    out1 = jax.block_until_ready(run(x1))
    assert out1.shape == (B, C, 2 * H, 2 * W), out1.shape
    assert out1.dtype == jnp.float32
    np.testing.assert_allclose(np.asarray(out1),
                               idwt_ref_numpy(np.asarray(x1), filters),
                               rtol=1e-4, atol=1e-4)

    # Case 2: non-power-of-two width + forced small row blocks.
    # -> narrow split path (GW = 96) and ragged (partial) row tiles.
    B2, C2, H2, W2 = 1, 3, 20, 24
    x2 = jax.random.normal(k2, (B2, 4 * C2, H2, W2), dtype=jnp.float32)
    out2 = jax.block_until_ready(run_small_blocks(x2))
    assert out2.shape == (B2, C2, 2 * H2, 2 * W2), out2.shape
    np.testing.assert_allclose(np.asarray(out2),
                               idwt_ref_numpy(np.asarray(x2), filters),
                               rtol=1e-4, atol=1e-4)

    # Case 3: wide input (W > 128) -> column-tiled path with a ragged last
    # column tile (W = 160, Wt = 128), bounded contraction / mix matrix.
    B3, C3, H3, W3 = 1, 2, 8, 160
    x3 = jax.random.normal(k3, (B3, 4 * C3, H3, W3), dtype=jnp.float32)
    out3 = jax.block_until_ready(run(x3))
    assert out3.shape == (B3, C3, 2 * H3, 2 * W3), out3.shape
    np.testing.assert_allclose(np.asarray(out3),
                               idwt_ref_numpy(np.asarray(x3), filters),
                               rtol=1e-4, atol=1e-4)

    print("KERNEL_OK")
</pallas_src>

<mosaic_0001>
module attributes {stable_mosaic.version = 11 : i64} {
  func.func @_idwt_kernel_fused(%arg0: i32, %arg1: i32, %arg2: memref<512x512xbf16, #tpu.memory_space<vmem>>, %arg3: memref<1x4x8x128xf32, #tpu.memory_space<vmem>>, %arg4: memref<1x8x512xf32, #tpu.memory_space<vmem>>) attributes {dimension_semantics = [#tpu.dimension_semantics<parallel>, #tpu.dimension_semantics<parallel>], iteration_bounds = array<i64: 2, 1>, scalar_prefetch = 0 : i64, scratch_operands = 0 : i64, tpu.core_type = #tpu.core_type<tc>, window_params = [{pipeline_mode = #tpu.pipeline_mode<synchronous>, transform_indices = @transform_0, window_bounds = array<i64: 512, 512>}, {transform_indices = @transform_1, window_bounds = array<i64: 1, 4, 8, 128>}, {transform_indices = @transform_2, window_bounds = array<i64: 1, 8, 512>}]} {
    %c0 = arith.constant 0 : index
    %c0_0 = arith.constant 0 : index
    %c0_1 = arith.constant 0 : index
    %c0_2 = arith.constant 0 : index
    %0 = vector.load %arg3[%c0, %c0_0, %c0_1, %c0_2] : memref<1x4x8x128xf32, #tpu.memory_space<vmem>>, vector<1x1x8x128xf32>
    %1 = vector.shape_cast %0 : vector<1x1x8x128xf32> to vector<8x128xf32>
    %c0_3 = arith.constant 0 : index
    %c1 = arith.constant 1 : index
    %c0_4 = arith.constant 0 : index
    %c0_5 = arith.constant 0 : index
    %2 = vector.load %arg3[%c0_3, %c1, %c0_4, %c0_5] : memref<1x4x8x128xf32, #tpu.memory_space<vmem>>, vector<1x1x8x128xf32>
    %3 = vector.shape_cast %2 : vector<1x1x8x128xf32> to vector<8x128xf32>
    %c0_6 = arith.constant 0 : index
    %c2 = arith.constant 2 : index
    %c0_7 = arith.constant 0 : index
    %c0_8 = arith.constant 0 : index
    %4 = vector.load %arg3[%c0_6, %c2, %c0_7, %c0_8] : memref<1x4x8x128xf32, #tpu.memory_space<vmem>>, vector<1x1x8x128xf32>
    %5 = vector.shape_cast %4 : vector<1x1x8x128xf32> to vector<8x128xf32>
    %c0_9 = arith.constant 0 : index
    %c3 = arith.constant 3 : index
    %c0_10 = arith.constant 0 : index
    %c0_11 = arith.constant 0 : index
    %6 = vector.load %arg3[%c0_9, %c3, %c0_10, %c0_11] : memref<1x4x8x128xf32, #tpu.memory_space<vmem>>, vector<1x1x8x128xf32>
    %7 = vector.shape_cast %6 : vector<1x1x8x128xf32> to vector<8x128xf32>
    %8 = tpu.concatenate %1, %3, %5, %7 in 1 : vector<8x128xf32>, vector<8x128xf32>, vector<8x128xf32>, vector<8x128xf32> -> vector<8x512xf32>
    %9 = arith.truncf %8 : vector<8x512xf32> to vector<8x512xbf16>
    %10 = arith.extf %9 : vector<8x512xbf16> to vector<8x512xf32>
    %11 = arith.subf %8, %10 : vector<8x512xf32>
    %12 = arith.truncf %11 : vector<8x512xf32> to vector<8x512xbf16>
    %c0_12 = arith.constant 0 : index
    %c0_13 = arith.constant 0 : index
    %13 = vector.load %arg2[%c0_12, %c0_13] : memref<512x512xbf16, #tpu.memory_space<vmem>>, vector<512x512xbf16>
    %cst = arith.constant dense<0.000000e+00> : vector<8x512xf32>
    %14 = tpu.matmul %9, %13, %cst {dimension_numbers = #tpu.dot_dimension_numbers<[1], [0], [0], [1], [0, 0, 1, 1], [], []>} : vector<8x512xbf16>, vector<512x512xbf16>, vector<8x512xf32> -> vector<8x512xf32>
    %cst_14 = arith.constant dense<0.000000e+00> : vector<8x512xf32>
    %15 = tpu.matmul %12, %13, %cst_14 {dimension_numbers = #tpu.dot_dimension_numbers<[1], [0], [0], [1], [0, 0, 1, 1], [], []>} : vector<8x512xbf16>, vector<512x512xbf16>, vector<8x512xf32> -> vector<8x512xf32>
    %16 = arith.addf %14, %15 : vector<8x512xf32>
    %c0_15 = arith.constant 0 : index
    %c0_16 = arith.constant 0 : index
    %c0_17 = arith.constant 0 : index
    %17 = vector.load %arg4[%c0_15, %c0_16, %c0_17] : memref<1x8x512xf32, #tpu.memory_space<vmem>>, vector<1x8x512xf32>
    %18 = vector.shape_cast %17 : vector<1x8x512xf32> to vector<8x512xf32>
    %19 = vector.shape_cast %16 : vector<8x512xf32> to vector<1x8x512xf32>
    tpu.vector_store %arg4[%c0_15, %c0_16, %c0_17], %19 {strides = array<i32>} : memref<1x8x512xf32, #tpu.memory_space<vmem>>, vector<1x8x512xf32>,
    return
  }
  func.func @transform_0(%arg0: i32, %arg1: i32) -> (i32, i32) {
    %c0_i32 = arith.constant 0 : i32
    %c0_i32_0 = arith.constant 0 : i32
    %c0_i32_1 = arith.constant 0 : i32
    return %c0_i32, %c0_i32_0 : i32, i32
  }
  func.func @transform_1(%arg0: i32, %arg1: i32) -> (i32, i32, i32, i32) {
    %c0_i32 = arith.constant 0 : i32
    %c0_i32_0 = arith.constant 0 : i32
    %c0_i32_1 = arith.constant 0 : i32
    return %arg0, %c0_i32, %arg1, %c0_i32_0 : i32, i32, i32, i32
  }
  func.func @transform_2(%arg0: i32, %arg1: i32) -> (i32, i32, i32) {
    %c0_i32 = arith.constant 0 : i32
    %c0_i32_0 = arith.constant 0 : i32
    return %arg0, %arg1, %c0_i32 : i32, i32, i32
  }
}

</mosaic_0001>

<llo_original>
// kernel: idwt_2d.1
$region0: #{idwt_2d.1}
  #allocation0 [shape = 'u32[]', space=smem, size = 0x4, offset = 0x4, fixed_abs, tag = 'smem constant byte address 0x4 - core index']
  #allocation1 [shape = 'u32[72,128]{1,0:T(1,128)}', space=vmem, size = 0x9000, scoped, tag = 'internal scratch']
  %s0 = inlined_call_operand.hbm [shape: bf16[512,512], index: 0, kind: input, shape index: {}]
  %s1 = inlined_call_operand.vmem [shape: f32[2,4,8,128], index: 1, kind: input, shape index: {}]
  %s2 = inlined_call_operand.vmem [shape: f32[2,8,512], index: 2, kind: output, shape index: {}]
  %s3 = sld [smem:[#allocation0]]
  $region45: #{idwt_2d.1} parent=0
    _
  %s5 = ssub.s32 1, %s3
  %s6 = scalar_select 0, %s5, %s3
  $region1: #{idwt_2d.1} parent=0
    #allocation2 [shape = 'u8[524288]{0}', space=vmem, size = 0x80000, scoped, tag = 'input window, operand 0, single buffered']
    #allocation3 [shape = 's32[2]{0}', space=sflag, size = 0x8, scoped, tag = 'scoped memory for idwt_2d.1']
    %7 = vsyncpa [#allocation3], 0
    loop: start=0, step=1, limit=4
    $region2: #{idwt_2d.1} parent=1 // loop_pre_header
      _
    $region3: #{idwt_2d.1} parent=1 // loop_header
      %s9 = sphi 0, %s13
      %p10 = scmp.ge.s32.totalorder %s9, 4
      %s16 = sphi 0, %s28
      %s17 = sphi 0, %s24
      %s18 = sphi 0, %s16
      %s19 = sphi 0, %s17
      %s20 = sphi 0, %s18
      %s21 = sphi 0, %s19
      %s29 = sphi 0, %s29
      %s31 = sphi 0, %s29
      %s32 = sphi 0, %s31
      %s46 = sphi 0, %s32
      %s54 = sphi 0, %s56
      %s57 = sphi 0, %s54
      %s58 = sphi 0, %s57
      %s74 = sphi 0, %s58
      %s82 = sphi 0, %s84
      %s85 = sphi 0, %s82
      %s86 = sphi 0, %s85
      %s102 = sphi 0, %s86
    $region4: #{idwt_2d.1} parent=1 // loop_header_branch
      %12 = sbr.rel (%p10) target = $region8
    $region5: #{idwt_2d.1} parent=1 // loop_body
      %s14 = ssub.s32 %s9, 1
      %s15 = ssub.s32 %s9, 2
      %s22 = sadd.s32 1, %s17
      %p23 = scmp.ge.s32.totalorder %s22, 1
      %s24 = scalar_select %p23, 0, %s22
      %s25 = sadd.s32 1, %s16
      %s26 = scalar_select %p23, %s25, %s16
      %p27 = scmp.ge.s32.totalorder %s26, 2
      %s28 = scalar_select %p27, 0, %s26
      %s30 = sadd.s32 %s29, 1
      %p33 = scmp.eq.s32.totalorder %s9, 1
      %p34 = scmp.ne.s32.totalorder %s29, %s31
      %p35 = scmp.eq.s32.totalorder %s9, 0
      %p36 = por %p34, %p35
      %p37 = scmp.ne.s32.totalorder %s29, %s31
      %p38 = scmp.eq.s32.totalorder %s14, 1
      %p39 = por %p37, %p38
      %p40 = scmp.ne.s32.totalorder %s31, %s32
      %p41 = scmp.eq.s32.totalorder %s14, 0
      %p42 = por %p40, %p41
      %p43 = scmp.ne.s32.totalorder %s31, %s32
      %p44 = scmp.eq.s32.totalorder %s15, 1
      %p45 = por %p43, %p44
      %p47 = scmp.ne.s32.totalorder %s32, %s46
      %p48 = scmp.eq.s32.totalorder %s15, 0
      %p49 = por %p47, %p48
      %s50 = ssub.s32 %s16, %s28
      %s51 = ssub.s32 %s17, %s24
      %s52 = sor.u32 %s50, %s51
      %p53 = scmp.eq.s32.totalorder %s52, 0
      %s55 = sadd.s32 %s54, 1
      %s56 = scalar_select %p53, %s54, %s55
      %p59 = pneg %p53
      %p60 = scmp.eq.s32.totalorder %s9, 1
      %p61 = por %p59, %p60
      %p62 = scmp.ne.s32.totalorder %s54, %s57
      %p63 = scmp.eq.s32.totalorder %s9, 0
      %p64 = por %p62, %p63
      %p65 = scmp.ne.s32.totalorder %s54, %s57
      %p66 = scmp.eq.s32.totalorder %s14, 1
      %p67 = por %p65, %p66
      %p68 = scmp.ne.s32.totalorder %s57, %s58
      %p69 = scmp.eq.s32.totalorder %s14, 0
      %p70 = por %p68, %p69
      %p71 = scmp.ne.s32.totalorder %s57, %s58
      %p72 = scmp.eq.s32.totalorder %s15, 1
      %p73 = por %p71, %p72
      %p75 = scmp.ne.s32.totalorder %s58, %s74
      %p76 = scmp.eq.s32.totalorder %s15, 0
      %p77 = por %p75, %p76
      %s78 = ssub.s32 %s16, %s28
      %s79 = ssub.s32 %s17, %s24
      %s80 = sor.u32 %s78, %s79
      %p81 = scmp.eq.s32.totalorder %s80, 0
      %s83 = sadd.s32 %s82, 1
      %s84 = scalar_select %p81, %s82, %s83
      %p87 = pneg %p81
      %p88 = scmp.eq.s32.totalorder %s9, 1
      %p89 = por %p87, %p88
      %p90 = scmp.ne.s32.totalorder %s82, %s85
      %p91 = scmp.eq.s32.totalorder %s9, 0
      %p92 = por %p90, %p91
      %p93 = scmp.ne.s32.totalorder %s82, %s85
      %p94 = scmp.eq.s32.totalorder %s14, 1
      %p95 = por %p93, %p94
      %p96 = scmp.ne.s32.totalorder %s85, %s86
      %p97 = scmp.eq.s32.totalorder %s14, 0
      %p98 = por %p96, %p97
      %p99 = scmp.ne.s32.totalorder %s85, %s86
      %p100 = scmp.eq.s32.totalorder %s15, 1
      %p101 = por %p99, %p100
      %p103 = scmp.ne.s32.totalorder %s86, %s102
      %p104 = scmp.eq.s32.totalorder %s15, 0
      %p105 = por %p103, %p104
      %p106 = scmp.le.s32.totalorder 1, %s9
      %p107 = scmp.lt.s32.totalorder %s9, 3
      %p108 = pnand %p106, %p107
      %p109 = pneg %p108
      // Predicated region
      $region9: #{idwt_2d.1} parent=5 // pred_check
        _
      $region10: #{idwt_2d.1} parent=5 // pred_check_branch
        %111 = sbr.rel (%p108) target = $region12
      $region11: #{idwt_2d.1} parent=5 // pred_region
        %s112 = ssub.s32 %s9, 1
        // Predicated region
        $region13: #{idwt_2d.1} parent=11 // pred_check
          %p113 = pneg %p42
        $region14: #{idwt_2d.1} parent=11 // pred_check_branch
          %115 = sbr.rel (%p113) target = $region16
        $region15: #{idwt_2d.1} parent=11 // pred_region
          %117 = vsyncadd [#allocation3], 0
          %s118 = sshll.u32 %s0, 4
          %s119 = int_to_ptr.hbm [resolvable:$true] %s118
          %s120 = sshll.u32 [#allocation2], 4
          %s121 = int_to_ptr.vmem [resolvable:$true] %s120
          %126 = dma.hbm_to_vmem [thread:$0]  %s119, 16384, %s121, [#allocation3], 256, 256, 16
        $region16: #{idwt_2d.1} parent=11 // pred_fallthru
          _
      $region12: #{idwt_2d.1} parent=5 // pred_fallthru
        _
      %p127 = scmp.lt.s32.totalorder %s9, 2
      // Predicated region
      $region17: #{idwt_2d.1} parent=5 // pred_check
        %p128 = pneg %p127
      $region18: #{idwt_2d.1} parent=5 // pred_check_branch
        %130 = sbr.rel (%p128) target = $region20
      $region19: #{idwt_2d.1} parent=5 // pred_region
        // Predicated region
        $region21: #{idwt_2d.1} parent=19 // pred_check
          %p131 = pneg %p64
        $region22: #{idwt_2d.1} parent=19 // pred_check_branch
          %133 = sbr.rel (%p131) target = $region24
        $region23: #{idwt_2d.1} parent=19 // pred_region
          %p134 = scmp.lt.s32.totalorder %s16, 1
          %s135 = scalar_select %p134, %s16, 1
          %p136 = scmp.lt.s32.totalorder %s17, 0
          %s137 = scalar_select %p136, %s17, 0
          %s138 = smul.addr %s135, 4
          %s139 = sadd.s32 %s137, %s138
          %s140 = smul.addr %s139, 8
          %s141 = scalar_lea.vmem %s1, %s140
        $region24: #{idwt_2d.1} parent=19 // pred_fallthru
          _
      $region20: #{idwt_2d.1} parent=5 // pred_fallthru
        _
      %p142 = scmp.le.s32.totalorder 1, %s9
      %p143 = scmp.lt.s32.totalorder %s9, 3
      %p144 = pnand %p142, %p143
      %p145 = pneg %p144
      // Predicated region
      $region25: #{idwt_2d.1} parent=5 // pred_check
        _
      $region26: #{idwt_2d.1} parent=5 // pred_check_branch
        %147 = sbr.rel (%p144) target = $region28
      $region27: #{idwt_2d.1} parent=5 // pred_region
        %s148 = ssub.s32 %s9, 1
        // Predicated region
        $region29: #{idwt_2d.1} parent=27 // pred_check
          %p149 = pneg %p42
        $region30: #{idwt_2d.1} parent=27 // pred_check_branch
          %151 = sbr.rel (%p149) target = $region32
        $region31: #{idwt_2d.1} parent=27 // pred_region
          %153 = dma.done [#allocation3], 16384
        $region32: #{idwt_2d.1} parent=27 // pred_fallthru
          _
        %p154 = pneg %p42
        %p155 = pneg %p39
        %p156 = scmp.lt.s32.totalorder %s18, 1
        %s157 = scalar_select %p156, %s18, 1
        %p158 = scmp.lt.s32.totalorder %s19, 0
        %s159 = scalar_select %p158, %s19, 0
        %s160 = smul.addr %s157, 4
        %s161 = sadd.s32 %s159, %s160
        %s162 = smul.addr %s161, 8
        %s163 = scalar_lea.vmem %s1, %s162
        %p164 = pneg %p70
        %p165 = pneg %p67
        %p166 = pneg %p98
        %p167 = pneg %p95
        %p168 = scmp.lt.s32.totalorder %s18, 1
        %s169 = scalar_select %p168, %s18, 1
        %p170 = scmp.lt.s32.totalorder %s19, 0
        %s171 = scalar_select %p170, %s19, 0
        %s172 = smul.addr %s171, 4
        %s173 = smul.addr %s169, 4
        %s174 = sadd.s32 %s172, %s173
        %s175 = smul.addr %s174, 8
        %s176 = scalar_lea.vmem %s2, %s175
        %p177 = scmp.lt.s32.totalorder %s18, 1
        %s178 = scalar_select %p177, %s18, 1
        %p179 = scmp.lt.s32.totalorder %s19, 0
        %s180 = scalar_select %p179, %s19, 0
        %s181 = smul.addr %s178, 4
        %s182 = sadd.s32 %s180, %s181
        %s183 = smul.addr %s182, 8
        %s184 = scalar_lea.vmem %s1, %s183
        %p185 = scmp.lt.s32.totalorder %s18, 1
        %s186 = scalar_select %p185, %s18, 1
        %p187 = scmp.lt.s32.totalorder %s19, 0
        %s188 = scalar_select %p187, %s19, 0
        %s189 = smul.addr %s188, 4
        %s190 = smul.addr %s186, 4
        %s191 = sadd.s32 %s189, %s190
        %s192 = smul.addr %s191, 8
        %s193 = scalar_lea.vmem %s2, %s192
        %v194 = vld [vmem:[%s184] sm:$0xff]
        %s195 = scalar_lea.vmem %s184, 8
        %v196 = vld [vmem:[%s195] sm:$0xff]
        %s197 = scalar_lea.vmem %s184, 16
        %v198 = vld [vmem:[%s197] sm:$0xff]
        %s199 = scalar_lea.vmem %s184, 24
        %v200 = vld [vmem:[%s199] sm:$0xff]
        %v201 = vpack.c.bf16 %v196, %v194
        %v202 = vpack.c.bf16 %v200, %v198
        %v203 = vunpack.c.l.bf16 %v201
        %v204 = vunpack.c.h.bf16 %v201
        %v205 = vunpack.c.l.bf16 %v202
        %v206 = vunpack.c.h.bf16 %v202
        %v207 = vsub.f32 %v194, %v203
        %v208 = vsub.f32 %v196, %v204
        %v209 = vsub.f32 %v198, %v205
        %v210 = vsub.f32 %v200, %v206
        %v211 = vpack.c.bf16 %v207, %v207
        %v212 = vpack.c.bf16 %v208, %v208
        %v213 = vpack.c.bf16 %v209, %v209
        %v214 = vpack.c.bf16 %v210, %v210
        %v215 = vld [vmem:[#allocation2] sm:$0xff]
        %v216 = vld [vmem:[#allocation2 + $0x8] sm:$0xff]
        %v217 = vld [vmem:[#allocation2 + $0x10] sm:$0xff]
        %v218 = vld [vmem:[#allocation2 + $0x18] sm:$0xff]
        %v219 = vld [vmem:[#allocation2 + $0x20] sm:$0xff]
        %v220 = vld [vmem:[#allocation2 + $0x28] sm:$0xff]
        %v221 = vld [vmem:[#allocation2 + $0x30] sm:$0xff]
        %v222 = vld [vmem:[#allocation2 + $0x38] sm:$0xff]
        %v223 = vld [vmem:[#allocation2 + $0x40] sm:$0xff]
        %v224 = vld [vmem:[#allocation2 + $0x48] sm:$0xff]
        %v225 = vld [vmem:[#allocation2 + $0x50] sm:$0xff]
        %v226 = vld [vmem:[#allocation2 + $0x58] sm:$0xff]
        %v227 = vld [vmem:[#allocation2 + $0x60] sm:$0xff]
        %v228 = vld [vmem:[#allocation2 + $0x68] sm:$0xff]
        %v229 = vld [vmem:[#allocation2 + $0x70] sm:$0xff]
        %v230 = vld [vmem:[#allocation2 + $0x78] sm:$0xff]
        %v231 = vld [vmem:[#allocation2 + $0x80] sm:$0xff]
        %v232 = vld [vmem:[#allocation2 + $0x88] sm:$0xff]
        %v233 = vld [vmem:[#allocation2 + $0x90] sm:$0xff]
        %v234 = vld [vmem:[#allocation2 + $0x98] sm:$0xff]
        %v235 = vld [vmem:[#allocation2 + $0xa0] sm:$0xff]
        %v236 = vld [vmem:[#allocation2 + $0xa8] sm:$0xff]
        %v237 = vld [vmem:[#allocation2 + $0xb0] sm:$0xff]
        %v238 = vld [vmem:[#allocation2 + $0xb8] sm:$0xff]
        %v239 = vld [vmem:[#allocation2 + $0xc0] sm:$0xff]
        %v240 = vld [vmem:[#allocation2 + $0xc8] sm:$0xff]
        %v241 = vld [vmem:[#allocation2 + $0xd0] sm:$0xff]
        %v242 = vld [vmem:[#allocation2 + $0xd8] sm:$0xff]
        %v243 = vld [vmem:[#allocation2 + $0xe0] sm:$0xff]
        %v244 = vld [vmem:[#allocation2 + $0xe8] sm:$0xff]
        %v245 = vld [vmem:[#allocation2 + $0xf0] sm:$0xff]
        %v246 = vld [vmem:[#allocation2 + $0xf8] sm:$0xff]
        %v247 = vld [vmem:[#allocation2 + $0x100] sm:$0xff]
        %v248 = vld [vmem:[#allocation2 + $0x108] sm:$0xff]
        %v249 = vld [vmem:[#allocation2 + $0x110] sm:$0xff]
        %v250 = vld [vmem:[#allocation2 + $0x118] sm:$0xff]
        %v251 = vld [vmem:[#allocation2 + $0x120] sm:$0xff]
        %v252 = vld [vmem:[#allocation2 + $0x128] sm:$0xff]
        %v253 = vld [vmem:[#allocation2 + $0x130] sm:$0xff]
        %v254 = vld [vmem:[#allocation2 + $0x138] sm:$0xff]
        %v255 = vld [vmem:[#allocation2 + $0x140] sm:$0xff]
        %v256 = vld [vmem:[#allocation2 + $0x148] sm:$0xff]
        %v257 = vld [vmem:[#allocation2 + $0x150] sm:$0xff]
        %v258 = vld [vmem:[#allocation2 + $0x158] sm:$0xff]
        %v259 = vld [vmem:[#allocation2 + $0x160] sm:$0xff]
        %v260 = vld [vmem:[#allocation2 + $0x168] sm:$0xff]
        %v261 = vld [vmem:[#allocation2 + $0x170] sm:$0xff]
        %v262 = vld [vmem:[#allocation2 + $0x178] sm:$0xff]
        %v263 = vld [vmem:[#allocation2 + $0x180] sm:$0xff]
        %v264 = vld [vmem:[#allocation2 + $0x188] sm:$0xff]
        %v265 = vld [vmem:[#allocation2 + $0x190] sm:$0xff]
        %v266 = vld [vmem:[#allocation2 + $0x198] sm:$0xff]
        %v267 = vld [vmem:[#allocation2 + $0x1a0] sm:$0xff]
        %v268 = vld [vmem:[#allocation2 + $0x1a8] sm:$0xff]
        %v269 = vld [vmem:[#allocation2 + $0x1b0] sm:$0xff]
        %v270 = vld [vmem:[#allocation2 + $0x1b8] sm:$0xff]
        %v271 = vld [vmem:[#allocation2 + $0x1c0] sm:$0xff]
        %v272 = vld [vmem:[#allocation2 + $0x1c8] sm:$0xff]
        %v273 = vld [vmem:[#allocation2 + $0x1d0] sm:$0xff]
        %v274 = vld [vmem:[#allocation2 + $0x1d8] sm:$0xff]
        %v275 = vld [vmem:[#allocation2 + $0x1e0] sm:$0xff]
        %v276 = vld [vmem:[#allocation2 + $0x1e8] sm:$0xff]
        %v277 = vld [vmem:[#allocation2 + $0x1f0] sm:$0xff]
        %v278 = vld [vmem:[#allocation2 + $0x1f8] sm:$0xff]
        %v279 = vld [vmem:[#allocation2 + $0x200] sm:$0xff]
        %v280 = vld [vmem:[#allocation2 + $0x208] sm:$0xff]
        %v281 = vld [vmem:[#allocation2 + $0x210] sm:$0xff]
        %v282 = vld [vmem:[#allocation2 + $0x218] sm:$0xff]
        %v283 = vld [vmem:[#allocation2 + $0x220] sm:$0xff]
        %v284 = vld [vmem:[#allocation2 + $0x228] sm:$0xff]
        %v285 = vld [vmem:[#allocation2 + $0x230] sm:$0xff]
        %v286 = vld [vmem:[#allocation2 + $0x238] sm:$0xff]
        %v287 = vld [vmem:[#allocation2 + $0x240] sm:$0xff]
        %v288 = vld [vmem:[#allocation2 + $0x248] sm:$0xff]
        %v289 = vld [vmem:[#allocation2 + $0x250] sm:$0xff]
        %v290 = vld [vmem:[#allocation2 + $0x258] sm:$0xff]
        %v291 = vld [vmem:[#allocation2 + $0x260] sm:$0xff]
        %v292 = vld [vmem:[#allocation2 + $0x268] sm:$0xff]
        %v293 = vld [vmem:[#allocation2 + $0x270] sm:$0xff]
        %v294 = vld [vmem:[#allocation2 + $0x278] sm:$0xff]
        %v295 = vld [vmem:[#allocation2 + $0x280] sm:$0xff]
        %v296 = vld [vmem:[#allocation2 + $0x288] sm:$0xff]
        %v297 = vld [vmem:[#allocation2 + $0x290] sm:$0xff]
        %v298 = vld [vmem:[#allocation2 + $0x298] sm:$0xff]
        %v299 = vld [vmem:[#allocation2 + $0x2a0] sm:$0xff]
        %v300 = vld [vmem:[#allocation2 + $0x2a8] sm:$0xff]
        %v301 = vld [vmem:[#allocation2 + $0x2b0] sm:$0xff]
        %v302 = vld [vmem:[#allocation2 + $0x2b8] sm:$0xff]
        %v303 = vld [vmem:[#allocation2 + $0x2c0] sm:$0xff]
        %v304 = vld [vmem:[#allocation2 + $0x2c8] sm:$0xff]
        %v305 = vld [vmem:[#allocation2 + $0x2d0] sm:$0xff]
        %v306 = vld [vmem:[#allocation2 + $0x2d8] sm:$0xff]
        %v307 = vld [vmem:[#allocation2 + $0x2e0] sm:$0xff]
        %v308 = vld [vmem:[#allocation2 + $0x2e8] sm:$0xff]
        %v309 = vld [vmem:[#allocation2 + $0x2f0] sm:$0xff]
        %v310 = vld [vmem:[#allocation2 + $0x2f8] sm:$0xff]
        %v311 = vld [vmem:[#allocation2 + $0x300] sm:$0xff]
        %v312 = vld [vmem:[#allocation2 + $0x308] sm:$0xff]
        %v313 = vld [vmem:[#allocation2 + $0x310] sm:$0xff]
        %v314 = vld [vmem:[#allocation2 + $0x318] sm:$0xff]
        %v315 = vld [vmem:[#allocation2 + $0x320] sm:$0xff]
        %v316 = vld [vmem:[#allocation2 + $0x328] sm:$0xff]
        %v317 = vld [vmem:[#allocation2 + $0x330] sm:$0xff]
        %v318 = vld [vmem:[#allocation2 + $0x338] sm:$0xff]
        %v319 = vld [vmem:[#allocation2 + $0x340] sm:$0xff]
        %v320 = vld [vmem:[#allocation2 + $0x348] sm:$0xff]
        %v321 = vld [vmem:[#allocation2 + $0x350] sm:$0xff]
        %v322 = vld [vmem:[#allocation2 + $0x358] sm:$0xff]
        %v323 = vld [vmem:[#allocation2 + $0x360] sm:$0xff]
        %v324 = vld [vmem:[#allocation2 + $0x368] sm:$0xff]
        %v325 = vld [vmem:[#allocation2 + $0x370] sm:$0xff]
        %v326 = vld [vmem:[#allocation2 + $0x378] sm:$0xff]
        %v327 = vld [vmem:[#allocation2 + $0x380] sm:$0xff]
        %v328 = vld [vmem:[#allocation2 + $0x388] sm:$0xff]
        %v329 = vld [vmem:[#allocation2 + $0x390] sm:$0xff]
        %v330 = vld [vmem:[#allocation2 + $0x398] sm:$0xff]
        %v331 = vld [vmem:[#allocation2 + $0x3a0] sm:$0xff]
        %v332 = vld [vmem:[#allocation2 + $0x3a8] sm:$0xff]
        %v333 = vld [vmem:[#allocation2 + $0x3b0] sm:$0xff]
        %v334 = vld [vmem:[#allocation2 + $0x3b8] sm:$0xff]
        %v335 = vld [vmem:[#allocation2 + $0x3c0] sm:$0xff]
        %v336 = vld [vmem:[#allocation2 + $0x3c8] sm:$0xff]
        %v337 = vld [vmem:[#allocation2 + $0x3d0] sm:$0xff]
        %v338 = vld [vmem:[#allocation2 + $0x3d8] sm:$0xff]
        %v339 = vld [vmem:[#allocation2 + $0x3e0] sm:$0xff]
        %v340 = vld [vmem:[#allocation2 + $0x3e8] sm:$0xff]
        %v341 = vld [vmem:[#allocation2 + $0x3f0] sm:$0xff]
        %v342 = vld [vmem:[#allocation2 + $0x3f8] sm:$0xff]
        %v471 = vunpack.c.l.b16 %v215
        %v472 = vunpack.c.h.b16 %v215
        %v473 = vunpack.c.l.b16 %v216
        %v474 = vunpack.c.h.b16 %v216
        %v475 = vunpack.c.l.b16 %v217
        %v476 = vunpack.c.h.b16 %v217
        %v477 = vunpack.c.l.b16 %v218
        %v478 = vunpack.c.h.b16 %v218
        %v479 = vunpack.c.l.b16 %v219
        %v480 = vunpack.c.h.b16 %v219
        %v481 = vunpack.c.l.b16 %v220
        %v482 = vunpack.c.h.b16 %v220
        %v483 = vunpack.c.l.b16 %v221
        %v484 = vunpack.c.h.b16 %v221
        %v485 = vunpack.c.l.b16 %v222
        %v486 = vunpack.c.h.b16 %v222
        %v487 = vunpack.c.l.b16 %v223
        %v488 = vunpack.c.h.b16 %v223
        %v489 = vunpack.c.l.b16 %v224
        %v490 = vunpack.c.h.b16 %v224
        %v491 = vunpack.c.l.b16 %v225
        %v492 = vunpack.c.h.b16 %v225
        %v493 = vunpack.c.l.b16 %v226
        %v494 = vunpack.c.h.b16 %v226
        %v495 = vunpack.c.l.b16 %v227
        %v496 = vunpack.c.h.b16 %v227
        %v497 = vunpack.c.l.b16 %v228
        %v498 = vunpack.c.h.b16 %v228
        %v499 = vunpack.c.l.b16 %v229
        %v500 = vunpack.c.h.b16 %v229
        %v501 = vunpack.c.l.b16 %v230
        %v502 = vunpack.c.h.b16 %v230
        %v503 = vunpack.c.l.b16 %v231
        %v504 = vunpack.c.h.b16 %v231
        %v505 = vunpack.c.l.b16 %v232
        %v506 = vunpack.c.h.b16 %v232
        %v507 = vunpack.c.l.b16 %v233
        %v508 = vunpack.c.h.b16 %v233
        %v509 = vunpack.c.l.b16 %v234
        %v510 = vunpack.c.h.b16 %v234
        %v511 = vunpack.c.l.b16 %v235
        %v512 = vunpack.c.h.b16 %v235
        %v513 = vunpack.c.l.b16 %v236
        %v514 = vunpack.c.h.b16 %v236
        %v515 = vunpack.c.l.b16 %v237
        %v516 = vunpack.c.h.b16 %v237
        %v517 = vunpack.c.l.b16 %v238
        %v518 = vunpack.c.h.b16 %v238
        %v519 = vunpack.c.l.b16 %v239
        %v520 = vunpack.c.h.b16 %v239
        %v521 = vunpack.c.l.b16 %v240
        %v522 = vunpack.c.h.b16 %v240
        %v523 = vunpack.c.l.b16 %v241
        %v524 = vunpack.c.h.b16 %v241
        %v525 = vunpack.c.l.b16 %v242
        %v526 = vunpack.c.h.b16 %v242
        %v527 = vunpack.c.l.b16 %v243
        %v528 = vunpack.c.h.b16 %v243
        %v529 = vunpack.c.l.b16 %v244
        %v530 = vunpack.c.h.b16 %v244
        %v531 = vunpack.c.l.b16 %v245
        %v532 = vunpack.c.h.b16 %v245
        %v533 = vunpack.c.l.b16 %v246
        %v534 = vunpack.c.h.b16 %v246
        %v535 = vunpack.c.l.b16 %v247
        %v536 = vunpack.c.h.b16 %v247
        %v537 = vunpack.c.l.b16 %v248
        %v538 = vunpack.c.h.b16 %v248
        %v539 = vunpack.c.l.b16 %v249
        %v540 = vunpack.c.h.b16 %v249
        %v541 = vunpack.c.l.b16 %v250
        %v542 = vunpack.c.h.b16 %v250
        %v543 = vunpack.c.l.b16 %v251
        %v544 = vunpack.c.h.b16 %v251
        %v545 = vunpack.c.l.b16 %v252
        %v546 = vunpack.c.h.b16 %v252
        %v547 = vunpack.c.l.b16 %v253
        %v548 = vunpack.c.h.b16 %v253
        %v549 = vunpack.c.l.b16 %v254
        %v550 = vunpack.c.h.b16 %v254
        %v551 = vunpack.c.l.b16 %v255
        %v552 = vunpack.c.h.b16 %v255
        %v553 = vunpack.c.l.b16 %v256
        %v554 = vunpack.c.h.b16 %v256
        %v555 = vunpack.c.l.b16 %v257
        %v556 = vunpack.c.h.b16 %v257
        %v557 = vunpack.c.l.b16 %v258
        %v558 = vunpack.c.h.b16 %v258
        %v559 = vunpack.c.l.b16 %v259
        %v560 = vunpack.c.h.b16 %v259
        %v561 = vunpack.c.l.b16 %v260
        %v562 = vunpack.c.h.b16 %v260
        %v563 = vunpack.c.l.b16 %v261
        %v564 = vunpack.c.h.b16 %v261
        %v565 = vunpack.c.l.b16 %v262
        %v566 = vunpack.c.h.b16 %v262
        %v567 = vunpack.c.l.b16 %v263
        %v568 = vunpack.c.h.b16 %v263
        %v569 = vunpack.c.l.b16 %v264
        %v570 = vunpack.c.h.b16 %v264
        %v571 = vunpack.c.l.b16 %v265
        %v572 = vunpack.c.h.b16 %v265
        %v573 = vunpack.c.l.b16 %v266
        %v574 = vunpack.c.h.b16 %v266
        %v575 = vunpack.c.l.b16 %v267
        %v576 = vunpack.c.h.b16 %v267
        %v577 = vunpack.c.l.b16 %v268
        %v578 = vunpack.c.h.b16 %v268
        %v579 = vunpack.c.l.b16 %v269
        %v580 = vunpack.c.h.b16 %v269
        %v581 = vunpack.c.l.b16 %v270
        %v582 = vunpack.c.h.b16 %v270
        %v583 = vunpack.c.l.b16 %v271
        %v584 = vunpack.c.h.b16 %v271
        %v585 = vunpack.c.l.b16 %v272
        %v586 = vunpack.c.h.b16 %v272
        %v587 = vunpack.c.l.b16 %v273
        %v588 = vunpack.c.h.b16 %v273
        %v589 = vunpack.c.l.b16 %v274
        %v590 = vunpack.c.h.b16 %v274
        %v591 = vunpack.c.l.b16 %v275
        %v592 = vunpack.c.h.b16 %v275
        %v593 = vunpack.c.l.b16 %v276
        %v594 = vunpack.c.h.b16 %v276
        %v595 = vunpack.c.l.b16 %v277
        %v596 = vunpack.c.h.b16 %v277
        %v597 = vunpack.c.l.b16 %v278
        %v598 = vunpack.c.h.b16 %v278
        %v599 = vunpack.c.l.b16 %v279
        %v600 = vunpack.c.h.b16 %v279
        %v601 = vunpack.c.l.b16 %v280
        %v602 = vunpack.c.h.b16 %v280
        %v603 = vunpack.c.l.b16 %v281
        %v604 = vunpack.c.h.b16 %v281
        %v605 = vunpack.c.l.b16 %v282
        %v606 = vunpack.c.h.b16 %v282
        %v607 = vunpack.c.l.b16 %v283
        %v608 = vunpack.c.h.b16 %v283
        %v609 = vunpack.c.l.b16 %v284
        %v610 = vunpack.c.h.b16 %v284
        %v611 = vunpack.c.l.b16 %v285
        %v612 = vunpack.c.h.b16 %v285
        %v613 = vunpack.c.l.b16 %v286
        %v614 = vunpack.c.h.b16 %v286
        %v615 = vunpack.c.l.b16 %v287
        %v616 = vunpack.c.h.b16 %v287
        %v617 = vunpack.c.l.b16 %v288
        %v618 = vunpack.c.h.b16 %v288
        %v619 = vunpack.c.l.b16 %v289
        %v620 = vunpack.c.h.b16 %v289
        %v621 = vunpack.c.l.b16 %v290
        %v622 = vunpack.c.h.b16 %v290
        %v623 = vunpack.c.l.b16 %v291
        %v624 = vunpack.c.h.b16 %v291
        %v625 = vunpack.c.l.b16 %v292
        %v626 = vunpack.c.h.b16 %v292
        %v627 = vunpack.c.l.b16 %v293
        %v628 = vunpack.c.h.b16 %v293
        %v629 = vunpack.c.l.b16 %v294
        %v630 = vunpack.c.h.b16 %v294
        %v631 = vunpack.c.l.b16 %v295
        %v632 = vunpack.c.h.b16 %v295
        %v633 = vunpack.c.l.b16 %v296
        %v634 = vunpack.c.h.b16 %v296
        %v635 = vunpack.c.l.b16 %v297
        %v636 = vunpack.c.h.b16 %v297
        %v637 = vunpack.c.l.b16 %v298
        %v638 = vunpack.c.h.b16 %v298
        %v639 = vunpack.c.l.b16 %v299
        %v640 = vunpack.c.h.b16 %v299
        %v641 = vunpack.c.l.b16 %v300
        %v642 = vunpack.c.h.b16 %v300
        %v643 = vunpack.c.l.b16 %v301
        %v644 = vunpack.c.h.b16 %v301
        %v645 = vunpack.c.l.b16 %v302
        %v646 = vunpack.c.h.b16 %v302
        %v647 = vunpack.c.l.b16 %v303
        %v648 = vunpack.c.h.b16 %v303
        %v649 = vunpack.c.l.b16 %v304
        %v650 = vunpack.c.h.b16 %v304
        %v651 = vunpack.c.l.b16 %v305
        %v652 = vunpack.c.h.b16 %v305
        %v653 = vunpack.c.l.b16 %v306
        %v654 = vunpack.c.h.b16 %v306
        %v655 = vunpack.c.l.b16 %v307
        %v656 = vunpack.c.h.b16 %v307
        %v657 = vunpack.c.l.b16 %v308
        %v658 = vunpack.c.h.b16 %v308
        %v659 = vunpack.c.l.b16 %v309
        %v660 = vunpack.c.h.b16 %v309
        %v661 = vunpack.c.l.b16 %v310
        %v662 = vunpack.c.h.b16 %v310
        %v663 = vunpack.c.l.b16 %v311
        %v664 = vunpack.c.h.b16 %v311
        %v665 = vunpack.c.l.b16 %v312
        %v666 = vunpack.c.h.b16 %v312
        %v667 = vunpack.c.l.b16 %v313
        %v668 = vunpack.c.h.b16 %v313
        %v669 = vunpack.c.l.b16 %v314
        %v670 = vunpack.c.h.b16 %v314
        %v671 = vunpack.c.l.b16 %v315
        %v672 = vunpack.c.h.b16 %v315
        %v673 = vunpack.c.l.b16 %v316
        %v674 = vunpack.c.h.b16 %v316
        %v675 = vunpack.c.l.b16 %v317
        %v676 = vunpack.c.h.b16 %v317
        %v677 = vunpack.c.l.b16 %v318
        %v678 = vunpack.c.h.b16 %v318
        %v679 = vunpack.c.l.b16 %v319
        %v680 = vunpack.c.h.b16 %v319
        %v681 = vunpack.c.l.b16 %v320
        %v682 = vunpack.c.h.b16 %v320
        %v683 = vunpack.c.l.b16 %v321
        %v684 = vunpack.c.h.b16 %v321
        %v685 = vunpack.c.l.b16 %v322
        %v686 = vunpack.c.h.b16 %v322
        %v687 = vunpack.c.l.b16 %v323
        %v688 = vunpack.c.h.b16 %v323
        %v689 = vunpack.c.l.b16 %v324
        %v690 = vunpack.c.h.b16 %v324
        %v691 = vunpack.c.l.b16 %v325
        %v692 = vunpack.c.h.b16 %v325
        %v693 = vunpack.c.l.b16 %v326
        %v694 = vunpack.c.h.b16 %v326
        %v695 = vunpack.c.l.b16 %v327
        %v696 = vunpack.c.h.b16 %v327
        %v697 = vunpack.c.l.b16 %v328
        %v698 = vunpack.c.h.b16 %v328
        %v699 = vunpack.c.l.b16 %v329
        %v700 = vunpack.c.h.b16 %v329
        %v701 = vunpack.c.l.b16 %v330
        %v702 = vunpack.c.h.b16 %v330
        %v703 = vunpack.c.l.b16 %v331
        %v704 = vunpack.c.h.b16 %v331
        %v705 = vunpack.c.l.b16 %v332
        %v706 = vunpack.c.h.b16 %v332
        %v707 = vunpack.c.l.b16 %v333
        %v708 = vunpack.c.h.b16 %v333
        %v709 = vunpack.c.l.b16 %v334
        %v710 = vunpack.c.h.b16 %v334
        %v711 = vunpack.c.l.b16 %v335
        %v712 = vunpack.c.h.b16 %v335
        %v713 = vunpack.c.l.b16 %v336
        %v714 = vunpack.c.h.b16 %v336
        %v715 = vunpack.c.l.b16 %v337
        %v716 = vunpack.c.h.b16 %v337
        %v717 = vunpack.c.l.b16 %v338
        %v718 = vunpack.c.h.b16 %v338
        %v719 = vunpack.c.l.b16 %v339
        %v720 = vunpack.c.h.b16 %v339
        %v721 = vunpack.c.l.b16 %v340
        %v722 = vunpack.c.h.b16 %v340
        %v723 = vunpack.c.l.b16 %v341
        %v724 = vunpack.c.h.b16 %v341
        %v725 = vunpack.c.l.b16 %v342
        %v726 = vunpack.c.h.b16 %v342
        %v727 = vpack.c.b16 %v475, %v471
        %v728 = vpack.c.b16 %v476, %v472
        %v729 = vpack.c.b16 %v477, %v473
        %v730 = vpack.c.b16 %v478, %v474
        %v731 = vpack.c.b16 %v483, %v479
        %v732 = vpack.c.b16 %v484, %v480
        %v733 = vpack.c.b16 %v485, %v481
        %v734 = vpack.c.b16 %v486, %v482
        %v735 = vpack.c.b16 %v491, %v487
        %v736 = vpack.c.b16 %v492, %v488
        %v737 = vpack.c.b16 %v493, %v489
        %v738 = vpack.c.b16 %v494, %v490
        %v739 = vpack.c.b16 %v499, %v495
        %v740 = vpack.c.b16 %v500, %v496
        %v741 = vpack.c.b16 %v501, %v497
        %v742 = vpack.c.b16 %v502, %v498
        %v743 = vpack.c.b16 %v507, %v503
        %v744 = vpack.c.b16 %v508, %v504
        %v745 = vpack.c.b16 %v509, %v505
        %v746 = vpack.c.b16 %v510, %v506
        %v747 = vpack.c.b16 %v515, %v511
        %v748 = vpack.c.b16 %v516, %v512
        %v749 = vpack.c.b16 %v517, %v513
        %v750 = vpack.c.b16 %v518, %v514
        %v751 = vpack.c.b16 %v523, %v519
        %v752 = vpack.c.b16 %v524, %v520
        %v753 = vpack.c.b16 %v525, %v521
        %v754 = vpack.c.b16 %v526, %v522
        %v755 = vpack.c.b16 %v531, %v527
        %v756 = vpack.c.b16 %v532, %v528
        %v757 = vpack.c.b16 %v533, %v529
        %v758 = vpack.c.b16 %v534, %v530
        %v759 = vpack.c.b16 %v539, %v535
        %v760 = vpack.c.b16 %v540, %v536
        %v761 = vpack.c.b16 %v541, %v537
        %v762 = vpack.c.b16 %v542, %v538
        %v763 = vpack.c.b16 %v547, %v543
        %v764 = vpack.c.b16 %v548, %v544
        %v765 = vpack.c.b16 %v549, %v545
        %v766 = vpack.c.b16 %v550, %v546
        %v767 = vpack.c.b16 %v555, %v551
        %v768 = vpack.c.b16 %v556, %v552
        %v769 = vpack.c.b16 %v557, %v553
        %v770 = vpack.c.b16 %v558, %v554
        %v771 = vpack.c.b16 %v563, %v559
        %v772 = vpack.c.b16 %v564, %v560
        %v773 = vpack.c.b16 %v565, %v561
        %v774 = vpack.c.b16 %v566, %v562
        %v775 = vpack.c.b16 %v571, %v567
        %v776 = vpack.c.b16 %v572, %v568
        %v777 = vpack.c.b16 %v573, %v569
        %v778 = vpack.c.b16 %v574, %v570
        %v779 = vpack.c.b16 %v579, %v575
        %v780 = vpack.c.b16 %v580, %v576
        %v781 = vpack.c.b16 %v581, %v577
        %v782 = vpack.c.b16 %v582, %v578
        %v783 = vpack.c.b16 %v587, %v583
        %v784 = vpack.c.b16 %v588, %v584
        %v785 = vpack.c.b16 %v589, %v585
        %v786 = vpack.c.b16 %v590, %v586
        %v787 = vpack.c.b16 %v595, %v591
        %v788 = vpack.c.b16 %v596, %v592
        %v789 = vpack.c.b16 %v597, %v593
        %v790 = vpack.c.b16 %v598, %v594
        %v791 = vpack.c.b16 %v603, %v599
        %v792 = vpack.c.b16 %v604, %v600
        %v793 = vpack.c.b16 %v605, %v601
        %v794 = vpack.c.b16 %v606, %v602
        %v795 = vpack.c.b16 %v611, %v607
        %v796 = vpack.c.b16 %v612, %v608
        %v797 = vpack.c.b16 %v613, %v609
        %v798 = vpack.c.b16 %v614, %v610
        %v799 = vpack.c.b16 %v619, %v615
        %v800 = vpack.c.b16 %v620, %v616
        %v801 = vpack.c.b16 %v621, %v617
        %v802 = vpack.c.b16 %v622, %v618
        %v803 = vpack.c.b16 %v627, %v623
        %v804 = vpack.c.b16 %v628, %v624
        %v805 = vpack.c.b16 %v629, %v625
        %v806 = vpack.c.b16 %v630, %v626
        %v807 = vpack.c.b16 %v635, %v631
        %v808 = vpack.c.b16 %v636, %v632
        %v809 = vpack.c.b16 %v637, %v633
        %v810 = vpack.c.b16 %v638, %v634
        %v811 = vpack.c.b16 %v643, %v639
        %v812 = vpack.c.b16 %v644, %v640
        %v813 = vpack.c.b16 %v645, %v641
        %v814 = vpack.c.b16 %v646, %v642
        %v815 = vpack.c.b16 %v651, %v647
        %v816 = vpack.c.b16 %v652, %v648
        %v817 = vpack.c.b16 %v653, %v649
        %v818 = vpack.c.b16 %v654, %v650
        %v819 = vpack.c.b16 %v659, %v655
        %v820 = vpack.c.b16 %v660, %v656
        %v821 = vpack.c.b16 %v661, %v657
        %v822 = vpack.c.b16 %v662, %v658
        %v823 = vpack.c.b16 %v667, %v663
        %v824 = vpack.c.b16 %v668, %v664
        %v825 = vpack.c.b16 %v669, %v665
        %v826 = vpack.c.b16 %v670, %v666
        %v827 = vpack.c.b16 %v675, %v671
        %v828 = vpack.c.b16 %v676, %v672
        %v829 = vpack.c.b16 %v677, %v673
        %v830 = vpack.c.b16 %v678, %v674
        %v831 = vpack.c.b16 %v683, %v679
        %v832 = vpack.c.b16 %v684, %v680
        %v833 = vpack.c.b16 %v685, %v681
        %v834 = vpack.c.b16 %v686, %v682
        %v835 = vpack.c.b16 %v691, %v687
        %v836 = vpack.c.b16 %v692, %v688
        %v837 = vpack.c.b16 %v693, %v689
        %v838 = vpack.c.b16 %v694, %v690
        %v839 = vpack.c.b16 %v699, %v695
        %v840 = vpack.c.b16 %v700, %v696
        %v841 = vpack.c.b16 %v701, %v697
        %v842 = vpack.c.b16 %v702, %v698
        %v843 = vpack.c.b16 %v707, %v703
        %v844 = vpack.c.b16 %v708, %v704
        %v845 = vpack.c.b16 %v709, %v705
        %v846 = vpack.c.b16 %v710, %v706
        %v847 = vpack.c.b16 %v715, %v711
        %v848 = vpack.c.b16 %v716, %v712
        %v849 = vpack.c.b16 %v717, %v713
        %v850 = vpack.c.b16 %v718, %v714
        %v851 = vpack.c.b16 %v723, %v719
        %v852 = vpack.c.b16 %v724, %v720
        %v853 = vpack.c.b16 %v725, %v721
        %v854 = vpack.c.b16 %v726, %v722
        %983 = vmatpush.bf16.msra.mxu0 %v755
        %984 = vmatpush.bf16.msra.mxu0 %v751
        %985 = vmatpush.bf16.msra.mxu0 %v747
        %986 = vmatpush.bf16.msra.mxu0 %v743
        %987 = vmatpush.bf16.msra.mxu0 %v739
        %988 = vmatpush.bf16.msra.mxu0 %v735
        %989 = vmatpush.bf16.msra.mxu0 %v731
        %990 = vmatpush.bf16.msra.mxu0 %v727
        %991 = vmatmul.bf16.gmra.mxu0 %v211
        %v992 = vpop.f32.mrf.mxu0
        %v993 = vadd.f32 0.0, %v992
        %v994 = vpop.f32.mrf.mxu0
        %995 = vdwg.mxu0
        %996 = vmatpush.bf16.msra.mxu0 %v787
        %997 = vmatpush.bf16.msra.mxu0 %v783
        %998 = vmatpush.bf16.msra.mxu0 %v779
        %999 = vmatpush.bf16.msra.mxu0 %v775
        %1000 = vmatpush.bf16.msra.mxu0 %v771
        %1001 = vmatpush.bf16.msra.mxu0 %v767
        %1002 = vmatpush.bf16.msra.mxu0 %v763
        %1003 = vmatpush.bf16.msra.mxu0 %v759
        %1004 = vmatmul.bf16.gmra.mxu0 %v212
        %v1005 = vpop.f32.mrf.mxu0
        %v1006 = vadd.f32 %v993, %v1005
        %v1007 = vpop.f32.mrf.mxu0
        %1008 = vdwg.mxu0
        %1009 = vmatpush.bf16.msra.mxu0 %v819
        %1010 = vmatpush.bf16.msra.mxu0 %v815
        %1011 = vmatpush.bf16.msra.mxu0 %v811
        %1012 = vmatpush.bf16.msra.mxu0 %v807
        %1013 = vmatpush.bf16.msra.mxu0 %v803
        %1014 = vmatpush.bf16.msra.mxu0 %v799
        %1015 = vmatpush.bf16.msra.mxu0 %v795
        %1016 = vmatpush.bf16.msra.mxu0 %v791
        %1017 = vmatmul.bf16.gmra.mxu0 %v213
        %v1018 = vpop.f32.mrf.mxu0
        %v1019 = vadd.f32 %v1006, %v1018
        %v1020 = vpop.f32.mrf.mxu0
        %1021 = vdwg.mxu0
        %1022 = vmatpush.bf16.msra.mxu0 %v851
        %1023 = vmatpush.bf16.msra.mxu0 %v847
        %1024 = vmatpush.bf16.msra.mxu0 %v843
        %1025 = vmatpush.bf16.msra.mxu0 %v839
        %1026 = vmatpush.bf16.msra.mxu0 %v835
        %1027 = vmatpush.bf16.msra.mxu0 %v831
        %1028 = vmatpush.bf16.msra.mxu0 %v827
        %1029 = vmatpush.bf16.msra.mxu0 %v823
        %1030 = vmatmul.bf16.gmra.mxu0 %v214
        %v1031 = vpop.f32.mrf.mxu0
        %v1032 = vadd.f32 %v1019, %v1031
        %v1033 = vpop.f32.mrf.mxu0
        %1034 = vdwg.mxu0
        %1035 = vmatpush.bf16.msra.mxu0 %v756
        %1036 = vmatpush.bf16.msra.mxu0 %v752
        %1037 = vmatpush.bf16.msra.mxu0 %v748
        %1038 = vmatpush.bf16.msra.mxu0 %v744
        %1039 = vmatpush.bf16.msra.mxu0 %v740
        %1040 = vmatpush.bf16.msra.mxu0 %v736
        %1041 = vmatpush.bf16.msra.mxu0 %v732
        %1042 = vmatpush.bf16.msra.mxu0 %v728
        %1043 = vmatmul.bf16.gmra.mxu0 %v211
        %v1044 = vpop.f32.mrf.mxu0
        %v1045 = vadd.f32 0.0, %v1044
        %v1046 = vpop.f32.mrf.mxu0
        %1047 = vdwg.mxu0
        %1048 = vmatpush.bf16.msra.mxu0 %v788
        %1049 = vmatpush.bf16.msra.mxu0 %v784
        %1050 = vmatpush.bf16.msra.mxu0 %v780
        %1051 = vmatpush.bf16.msra.mxu0 %v776
        %1052 = vmatpush.bf16.msra.mxu0 %v772
        %1053 = vmatpush.bf16.msra.mxu0 %v768
        %1054 = vmatpush.bf16.msra.mxu0 %v764
        %1055 = vmatpush.bf16.msra.mxu0 %v760
        %1056 = vmatmul.bf16.gmra.mxu0 %v212
        %v1057 = vpop.f32.mrf.mxu0
        %v1058 = vadd.f32 %v1045, %v1057
        %v1059 = vpop.f32.mrf.mxu0
        %1060 = vdwg.mxu0
        %1061 = vmatpush.bf16.msra.mxu0 %v820
        %1062 = vmatpush.bf16.msra.mxu0 %v816
        %1063 = vmatpush.bf16.msra.mxu0 %v812
        %1064 = vmatpush.bf16.msra.mxu0 %v808
        %1065 = vmatpush.bf16.msra.mxu0 %v804
        %1066 = vmatpush.bf16.msra.mxu0 %v800
        %1067 = vmatpush.bf16.msra.mxu0 %v796
        %1068 = vmatpush.bf16.msra.mxu0 %v792
        %1069 = vmatmul.bf16.gmra.mxu0 %v213
        %v1070 = vpop.f32.mrf.mxu0
        %v1071 = vadd.f32 %v1058, %v1070
        %v1072 = vpop.f32.mrf.mxu0
        %1073 = vdwg.mxu0
        %1074 = vmatpush.bf16.msra.mxu0 %v852
        %1075 = vmatpush.bf16.msra.mxu0 %v848
        %1076 = vmatpush.bf16.msra.mxu0 %v844
        %1077 = vmatpush.bf16.msra.mxu0 %v840
        %1078 = vmatpush.bf16.msra.mxu0 %v836
        %1079 = vmatpush.bf16.msra.mxu0 %v832
        %1080 = vmatpush.bf16.msra.mxu0 %v828
        %1081 = vmatpush.bf16.msra.mxu0 %v824
        %1082 = vmatmul.bf16.gmra.mxu0 %v214
        %v1083 = vpop.f32.mrf.mxu0
        %v1084 = vadd.f32 %v1071, %v1083
        %v1085 = vpop.f32.mrf.mxu0
        %1086 = vdwg.mxu0
        %1087 = vmatpush.bf16.msra.mxu0 %v757
        %1088 = vmatpush.bf16.msra.mxu0 %v753
        %1089 = vmatpush.bf16.msra.mxu0 %v749
        %1090 = vmatpush.bf16.msra.mxu0 %v745
        %1091 = vmatpush.bf16.msra.mxu0 %v741
        %1092 = vmatpush.bf16.msra.mxu0 %v737
        %1093 = vmatpush.bf16.msra.mxu0 %v733
        %1094 = vmatpush.bf16.msra.mxu0 %v729
        %1095 = vmatmul.bf16.gmra.mxu0 %v211
        %v1096 = vpop.f32.mrf.mxu0
        %v1097 = vadd.f32 0.0, %v1096
        %v1098 = vpop.f32.mrf.mxu0
        %1099 = vdwg.mxu0
        %1100 = vmatpush.bf16.msra.mxu0 %v789
        %1101 = vmatpush.bf16.msra.mxu0 %v785
        %1102 = vmatpush.bf16.msra.mxu0 %v781
        %1103 = vmatpush.bf16.msra.mxu0 %v777
        %1104 = vmatpush.bf16.msra.mxu0 %v773
        %1105 = vmatpush.bf16.msra.mxu0 %v769
        %1106 = vmatpush.bf16.msra.mxu0 %v765
        %1107 = vmatpush.bf16.msra.mxu0 %v761
        %1108 = vmatmul.bf16.gmra.mxu0 %v212
        %v1109 = vpop.f32.mrf.mxu0
        %v1110 = vadd.f32 %v1097, %v1109
        %v1111 = vpop.f32.mrf.mxu0
        %1112 = vdwg.mxu0
        %1113 = vmatpush.bf16.msra.mxu0 %v821
        %1114 = vmatpush.bf16.msra.mxu0 %v817
        %1115 = vmatpush.bf16.msra.mxu0 %v813
        %1116 = vmatpush.bf16.msra.mxu0 %v809
        %1117 = vmatpush.bf16.msra.mxu0 %v805
        %1118 = vmatpush.bf16.msra.mxu0 %v801
        %1119 = vmatpush.bf16.msra.mxu0 %v797
        %1120 = vmatpush.bf16.msra.mxu0 %v793
        %1121 = vmatmul.bf16.gmra.mxu0 %v213
        %v1122 = vpop.f32.mrf.mxu0
        %v1123 = vadd.f32 %v1110, %v1122
        %v1124 = vpop.f32.mrf.mxu0
        %1125 = vdwg.mxu0
        %1126 = vmatpush.bf16.msra.mxu0 %v853
        %1127 = vmatpush.bf16.msra.mxu0 %v849
        %1128 = vmatpush.bf16.msra.mxu0 %v845
        %1129 = vmatpush.bf16.msra.mxu0 %v841
        %1130 = vmatpush.bf16.msra.mxu0 %v837
        %1131 = vmatpush.bf16.msra.mxu0 %v833
        %1132 = vmatpush.bf16.msra.mxu0 %v829
        %1133 = vmatpush.bf16.msra.mxu0 %v825
        %1134 = vmatmul.bf16.gmra.mxu0 %v214
        %v1135 = vpop.f32.mrf.mxu0
        %v1136 = vadd.f32 %v1123, %v1135
        %v1137 = vpop.f32.mrf.mxu0
        %1138 = vdwg.mxu0
        %1139 = vmatpush.bf16.msra.mxu0 %v758
        %1140 = vmatpush.bf16.msra.mxu0 %v754
        %1141 = vmatpush.bf16.msra.mxu0 %v750
        %1142 = vmatpush.bf16.msra.mxu0 %v746
        %1143 = vmatpush.bf16.msra.mxu0 %v742
        %1144 = vmatpush.bf16.msra.mxu0 %v738
        %1145 = vmatpush.bf16.msra.mxu0 %v734
        %1146 = vmatpush.bf16.msra.mxu0 %v730
        %1147 = vmatmul.bf16.gmra.mxu0 %v211
        %v1148 = vpop.f32.mrf.mxu0
        %v1149 = vadd.f32 0.0, %v1148
        %v1150 = vpop.f32.mrf.mxu0
        %1151 = vdwg.mxu0
        %1152 = vmatpush.bf16.msra.mxu0 %v790
        %1153 = vmatpush.bf16.msra.mxu0 %v786
        %1154 = vmatpush.bf16.msra.mxu0 %v782
        %1155 = vmatpush.bf16.msra.mxu0 %v778
        %1156 = vmatpush.bf16.msra.mxu0 %v774
        %1157 = vmatpush.bf16.msra.mxu0 %v770
        %1158 = vmatpush.bf16.msra.mxu0 %v766
        %1159 = vmatpush.bf16.msra.mxu0 %v762
        %1160 = vmatmul.bf16.gmra.mxu0 %v212
        %v1161 = vpop.f32.mrf.mxu0
        %v1162 = vadd.f32 %v1149, %v1161
        %v1163 = vpop.f32.mrf.mxu0
        %1164 = vdwg.mxu0
        %1165 = vmatpush.bf16.msra.mxu0 %v822
        %1166 = vmatpush.bf16.msra.mxu0 %v818
        %1167 = vmatpush.bf16.msra.mxu0 %v814
        %1168 = vmatpush.bf16.msra.mxu0 %v810
        %1169 = vmatpush.bf16.msra.mxu0 %v806
        %1170 = vmatpush.bf16.msra.mxu0 %v802
        %1171 = vmatpush.bf16.msra.mxu0 %v798
        %1172 = vmatpush.bf16.msra.mxu0 %v794
        %1173 = vmatmul.bf16.gmra.mxu0 %v213
        %v1174 = vpop.f32.mrf.mxu0
        %v1175 = vadd.f32 %v1162, %v1174
        %v1176 = vpop.f32.mrf.mxu0
        %1177 = vdwg.mxu0
        %1178 = vmatpush.bf16.msra.mxu0 %v854
        %1179 = vmatpush.bf16.msra.mxu0 %v850
        %1180 = vmatpush.bf16.msra.mxu0 %v846
        %1181 = vmatpush.bf16.msra.mxu0 %v842
        %1182 = vmatpush.bf16.msra.mxu0 %v838
        %1183 = vmatpush.bf16.msra.mxu0 %v834
        %1184 = vmatpush.bf16.msra.mxu0 %v830
        %1185 = vmatpush.bf16.msra.mxu0 %v826
        %1186 = vmatmul.bf16.gmra.mxu0 %v214
        %v1187 = vpop.f32.mrf.mxu0
        %v1188 = vadd.f32 %v1175, %v1187
        %v1189 = vpop.f32.mrf.mxu0
        %1190 = vdwg.mxu0
        %v1193 = vunpack.c.l.b16 %v201
        %v1194 = vunpack.c.h.b16 %v201
        %v1195 = vunpack.c.l.b16 %v202
        %v1196 = vunpack.c.h.b16 %v202
        %v1197 = vpack.c.b16 %v1193, %v1193
        %v1198 = vpack.c.b16 %v1194, %v1194
        %v1199 = vpack.c.b16 %v1195, %v1195
        %v1200 = vpack.c.b16 %v1196, %v1196
        %1205 = vmatpush.bf16.msra.mxu0 %v755
        %1206 = vmatpush.bf16.msra.mxu0 %v751
        %1207 = vmatpush.bf16.msra.mxu0 %v747
        %1208 = vmatpush.bf16.msra.mxu0 %v743
        %1209 = vmatpush.bf16.msra.mxu0 %v739
        %1210 = vmatpush.bf16.msra.mxu0 %v735
        %1211 = vmatpush.bf16.msra.mxu0 %v731
        %1212 = vmatpush.bf16.msra.mxu0 %v727
        %1213 = vmatmul.bf16.gmra.mxu0 %v1197
        %v1214 = vpop.f32.mrf.mxu0
        %v1215 = vadd.f32 %v1032, %v1214
        %v1216 = vpop.f32.mrf.mxu0
        %1217 = vdwg.mxu0
        %1218 = vmatpush.bf16.msra.mxu0 %v787
        %1219 = vmatpush.bf16.msra.mxu0 %v783
        %1220 = vmatpush.bf16.msra.mxu0 %v779
        %1221 = vmatpush.bf16.msra.mxu0 %v775
        %1222 = vmatpush.bf16.msra.mxu0 %v771
        %1223 = vmatpush.bf16.msra.mxu0 %v767
        %1224 = vmatpush.bf16.msra.mxu0 %v763
        %1225 = vmatpush.bf16.msra.mxu0 %v759
        %1226 = vmatmul.bf16.gmra.mxu0 %v1198
        %v1227 = vpop.f32.mrf.mxu0
        %v1228 = vadd.f32 %v1215, %v1227
        %v1229 = vpop.f32.mrf.mxu0
        %1230 = vdwg.mxu0
        %1231 = vmatpush.bf16.msra.mxu0 %v819
        %1232 = vmatpush.bf16.msra.mxu0 %v815
        %1233 = vmatpush.bf16.msra.mxu0 %v811
        %1234 = vmatpush.bf16.msra.mxu0 %v807
        %1235 = vmatpush.bf16.msra.mxu0 %v803
        %1236 = vmatpush.bf16.msra.mxu0 %v799
        %1237 = vmatpush.bf16.msra.mxu0 %v795
        %1238 = vmatpush.bf16.msra.mxu0 %v791
        %1239 = vmatmul.bf16.gmra.mxu0 %v1199
        %v1240 = vpop.f32.mrf.mxu0
        %v1241 = vadd.f32 %v1228, %v1240
        %v1242 = vpop.f32.mrf.mxu0
        %1243 = vdwg.mxu0
        %1244 = vmatpush.bf16.msra.mxu0 %v851
        %1245 = vmatpush.bf16.msra.mxu0 %v847
        %1246 = vmatpush.bf16.msra.mxu0 %v843
        %1247 = vmatpush.bf16.msra.mxu0 %v839
        %1248 = vmatpush.bf16.msra.mxu0 %v835
        %1249 = vmatpush.bf16.msra.mxu0 %v831
        %1250 = vmatpush.bf16.msra.mxu0 %v827
        %1251 = vmatpush.bf16.msra.mxu0 %v823
        %1252 = vmatmul.bf16.gmra.mxu0 %v1200
        %v1253 = vpop.f32.mrf.mxu0
        %v1254 = vadd.f32 %v1241, %v1253
        %v1255 = vpop.f32.mrf.mxu0
        %1256 = vdwg.mxu0
        %1257 = vmatpush.bf16.msra.mxu0 %v756
        %1258 = vmatpush.bf16.msra.mxu0 %v752
        %1259 = vmatpush.bf16.msra.mxu0 %v748
        %1260 = vmatpush.bf16.msra.mxu0 %v744
        %1261 = vmatpush.bf16.msra.mxu0 %v740
        %1262 = vmatpush.bf16.msra.mxu0 %v736
        %1263 = vmatpush.bf16.msra.mxu0 %v732
        %1264 = vmatpush.bf16.msra.mxu0 %v728
        %1265 = vmatmul.bf16.gmra.mxu0 %v1197
        %v1266 = vpop.f32.mrf.mxu0
        %v1267 = vadd.f32 %v1084, %v1266
        %v1268 = vpop.f32.mrf.mxu0
        %1269 = vdwg.mxu0
        %1270 = vmatpush.bf16.msra.mxu0 %v788
        %1271 = vmatpush.bf16.msra.mxu0 %v784
        %1272 = vmatpush.bf16.msra.mxu0 %v780
        %1273 = vmatpush.bf16.msra.mxu0 %v776
        %1274 = vmatpush.bf16.msra.mxu0 %v772
        %1275 = vmatpush.bf16.msra.mxu0 %v768
        %1276 = vmatpush.bf16.msra.mxu0 %v764
        %1277 = vmatpush.bf16.msra.mxu0 %v760
        %1278 = vmatmul.bf16.gmra.mxu0 %v1198
        %v1279 = vpop.f32.mrf.mxu0
        %v1280 = vadd.f32 %v1267, %v1279
        %v1281 = vpop.f32.mrf.mxu0
        %1282 = vdwg.mxu0
        %1283 = vmatpush.bf16.msra.mxu0 %v820
        %1284 = vmatpush.bf16.msra.mxu0 %v816
        %1285 = vmatpush.bf16.msra.mxu0 %v812
        %1286 = vmatpush.bf16.msra.mxu0 %v808
        %1287 = vmatpush.bf16.msra.mxu0 %v804
        %1288 = vmatpush.bf16.msra.mxu0 %v800
        %1289 = vmatpush.bf16.msra.mxu0 %v796
        %1290 = vmatpush.bf16.msra.mxu0 %v792
        %1291 = vmatmul.bf16.gmra.mxu0 %v1199
        %v1292 = vpop.f32.mrf.mxu0
        %v1293 = vadd.f32 %v1280, %v1292
        %v1294 = vpop.f32.mrf.mxu0
        %1295 = vdwg.mxu0
        %1296 = vmatpush.bf16.msra.mxu0 %v852
        %1297 = vmatpush.bf16.msra.mxu0 %v848
        %1298 = vmatpush.bf16.msra.mxu0 %v844
        %1299 = vmatpush.bf16.msra.mxu0 %v840
        %1300 = vmatpush.bf16.msra.mxu0 %v836
        %1301 = vmatpush.bf16.msra.mxu0 %v832
        %1302 = vmatpush.bf16.msra.mxu0 %v828
        %1303 = vmatpush.bf16.msra.mxu0 %v824
        %1304 = vmatmul.bf16.gmra.mxu0 %v1200
        %v1305 = vpop.f32.mrf.mxu0
        %v1306 = vadd.f32 %v1293, %v1305
        %v1307 = vpop.f32.mrf.mxu0
        %1308 = vdwg.mxu0
        %1309 = vmatpush.bf16.msra.mxu0 %v757
        %1310 = vmatpush.bf16.msra.mxu0 %v753
        %1311 = vmatpush.bf16.msra.mxu0 %v749
        %1312 = vmatpush.bf16.msra.mxu0 %v745
        %1313 = vmatpush.bf16.msra.mxu0 %v741
        %1314 = vmatpush.bf16.msra.mxu0 %v737
        %1315 = vmatpush.bf16.msra.mxu0 %v733
        %1316 = vmatpush.bf16.msra.mxu0 %v729
        %1317 = vmatmul.bf16.gmra.mxu0 %v1197
        %v1318 = vpop.f32.mrf.mxu0
        %v1319 = vadd.f32 %v1136, %v1318
        %v1320 = vpop.f32.mrf.mxu0
        %1321 = vdwg.mxu0
        %1322 = vmatpush.bf16.msra.mxu0 %v789
        %1323 = vmatpush.bf16.msra.mxu0 %v785
        %1324 = vmatpush.bf16.msra.mxu0 %v781
        %1325 = vmatpush.bf16.msra.mxu0 %v777
        %1326 = vmatpush.bf16.msra.mxu0 %v773
        %1327 = vmatpush.bf16.msra.mxu0 %v769
        %1328 = vmatpush.bf16.msra.mxu0 %v765
        %1329 = vmatpush.bf16.msra.mxu0 %v761
        %1330 = vmatmul.bf16.gmra.mxu0 %v1198
        %v1331 = vpop.f32.mrf.mxu0
        %v1332 = vadd.f32 %v1319, %v1331
        %v1333 = vpop.f32.mrf.mxu0
        %1334 = vdwg.mxu0
        %1335 = vmatpush.bf16.msra.mxu0 %v821
        %1336 = vmatpush.bf16.msra.mxu0 %v817
        %1337 = vmatpush.bf16.msra.mxu0 %v813
        %1338 = vmatpush.bf16.msra.mxu0 %v809
        %1339 = vmatpush.bf16.msra.mxu0 %v805
        %1340 = vmatpush.bf16.msra.mxu0 %v801
        %1341 = vmatpush.bf16.msra.mxu0 %v797
        %1342 = vmatpush.bf16.msra.mxu0 %v793
        %1343 = vmatmul.bf16.gmra.mxu0 %v1199
        %v1344 = vpop.f32.mrf.mxu0
        %v1345 = vadd.f32 %v1332, %v1344
        %v1346 = vpop.f32.mrf.mxu0
        %1347 = vdwg.mxu0
        %1348 = vmatpush.bf16.msra.mxu0 %v853
        %1349 = vmatpush.bf16.msra.mxu0 %v849
        %1350 = vmatpush.bf16.msra.mxu0 %v845
        %1351 = vmatpush.bf16.msra.mxu0 %v841
        %1352 = vmatpush.bf16.msra.mxu0 %v837
        %1353 = vmatpush.bf16.msra.mxu0 %v833
        %1354 = vmatpush.bf16.msra.mxu0 %v829
        %1355 = vmatpush.bf16.msra.mxu0 %v825
        %1356 = vmatmul.bf16.gmra.mxu0 %v1200
        %v1357 = vpop.f32.mrf.mxu0
        %v1358 = vadd.f32 %v1345, %v1357
        %v1359 = vpop.f32.mrf.mxu0
        %1360 = vdwg.mxu0
        %1361 = vmatpush.bf16.msra.mxu0 %v758
        %1362 = vmatpush.bf16.msra.mxu0 %v754
        %1363 = vmatpush.bf16.msra.mxu0 %v750
        %1364 = vmatpush.bf16.msra.mxu0 %v746
        %1365 = vmatpush.bf16.msra.mxu0 %v742
        %1366 = vmatpush.bf16.msra.mxu0 %v738
        %1367 = vmatpush.bf16.msra.mxu0 %v734
        %1368 = vmatpush.bf16.msra.mxu0 %v730
        %1369 = vmatmul.bf16.gmra.mxu0 %v1197
        %v1370 = vpop.f32.mrf.mxu0
        %v1371 = vadd.f32 %v1188, %v1370
        %v1372 = vpop.f32.mrf.mxu0
        %1373 = vdwg.mxu0
        %1374 = vmatpush.bf16.msra.mxu0 %v790
        %1375 = vmatpush.bf16.msra.mxu0 %v786
        %1376 = vmatpush.bf16.msra.mxu0 %v782
        %1377 = vmatpush.bf16.msra.mxu0 %v778
        %1378 = vmatpush.bf16.msra.mxu0 %v774
        %1379 = vmatpush.bf16.msra.mxu0 %v770
        %1380 = vmatpush.bf16.msra.mxu0 %v766
        %1381 = vmatpush.bf16.msra.mxu0 %v762
        %1382 = vmatmul.bf16.gmra.mxu0 %v1198
        %v1383 = vpop.f32.mrf.mxu0
        %v1384 = vadd.f32 %v1371, %v1383
        %v1385 = vpop.f32.mrf.mxu0
        %1386 = vdwg.mxu0
        %1387 = vmatpush.bf16.msra.mxu0 %v822
        %1388 = vmatpush.bf16.msra.mxu0 %v818
        %1389 = vmatpush.bf16.msra.mxu0 %v814
        %1390 = vmatpush.bf16.msra.mxu0 %v810
        %1391 = vmatpush.bf16.msra.mxu0 %v806
        %1392 = vmatpush.bf16.msra.mxu0 %v802
        %1393 = vmatpush.bf16.msra.mxu0 %v798
        %1394 = vmatpush.bf16.msra.mxu0 %v794
        %1395 = vmatmul.bf16.gmra.mxu0 %v1199
        %v1396 = vpop.f32.mrf.mxu0
        %v1397 = vadd.f32 %v1384, %v1396
        %v1398 = vpop.f32.mrf.mxu0
        %1399 = vdwg.mxu0
        %1400 = vmatpush.bf16.msra.mxu0 %v854
        %1401 = vmatpush.bf16.msra.mxu0 %v850
        %1402 = vmatpush.bf16.msra.mxu0 %v846
        %1403 = vmatpush.bf16.msra.mxu0 %v842
        %1404 = vmatpush.bf16.msra.mxu0 %v838
        %1405 = vmatpush.bf16.msra.mxu0 %v834
        %1406 = vmatpush.bf16.msra.mxu0 %v830
        %1407 = vmatpush.bf16.msra.mxu0 %v826
        %1408 = vmatmul.bf16.gmra.mxu0 %v1200
        %v1409 = vpop.f32.mrf.mxu0
        %v1410 = vadd.f32 %v1397, %v1409
        %v1411 = vpop.f32.mrf.mxu0
        %1412 = vdwg.mxu0
        %1413 = vst [vmem:[%s193] sm:$0xff] %v1254
        %1414 = vst [vmem:[%s193 + $0x8] sm:$0xff] %v1306
        %1415 = vst [vmem:[%s193 + $0x10] sm:$0xff] %v1358
        %1416 = vst [vmem:[%s193 + $0x18] sm:$0xff] %v1410
        %p1417 = scmp.lt.s32.totalorder %s18, 1
        %s1418 = scalar_select %p1417, %s18, 1
        %p1419 = scmp.lt.s32.totalorder %s19, 0
        %s1420 = scalar_select %p1419, %s19, 0
        %s1421 = smul.addr %s1420, 4
        %s1422 = smul.addr %s1418, 4
        %s1423 = sadd.s32 %s1421, %s1422
        %s1424 = smul.addr %s1423, 8
        %s1425 = scalar_lea.vmem %s2, %s1424
        // Predicated region
        $region33: #{idwt_2d.1} parent=27 // pred_check
          %p1426 = pneg %p95
        $region34: #{idwt_2d.1} parent=27 // pred_check_branch
          %1428 = sbr.rel (%p1426) target = $region36
        $region35: #{idwt_2d.1} parent=27 // pred_region
          _
        $region36: #{idwt_2d.1} parent=27 // pred_fallthru
          _
      $region28: #{idwt_2d.1} parent=5 // pred_fallthru
        _
      %p1429 = scmp.le.s32.totalorder 2, %s9
      // Predicated region
      $region37: #{idwt_2d.1} parent=5 // pred_check
        %p1430 = pneg %p1429
      $region38: #{idwt_2d.1} parent=5 // pred_check_branch
        %1432 = sbr.rel (%p1430) target = $region40
      $region39: #{idwt_2d.1} parent=5 // pred_region
        %s1433 = ssub.s32 %s9, 2
        // Predicated region
        $region41: #{idwt_2d.1} parent=39 // pred_check
          %p1434 = pneg %p101
        $region42: #{idwt_2d.1} parent=39 // pred_check_branch
          %1436 = sbr.rel (%p1434) target = $region44
        $region43: #{idwt_2d.1} parent=39 // pred_region
          %p1437 = scmp.lt.s32.totalorder %s20, 1
          %s1438 = scalar_select %p1437, %s20, 1
          %p1439 = scmp.lt.s32.totalorder %s21, 0
          %s1440 = scalar_select %p1439, %s21, 0
          %s1441 = smul.addr %s1440, 4
          %s1442 = smul.addr %s1438, 4
          %s1443 = sadd.s32 %s1441, %s1442
          %s1444 = smul.addr %s1443, 8
          %s1445 = scalar_lea.vmem %s2, %s1444
        $region44: #{idwt_2d.1} parent=39 // pred_fallthru
          _
      $region40: #{idwt_2d.1} parent=5 // pred_fallthru
        _
    $region6: #{idwt_2d.1} parent=1 // loop_footer
      %s13 = sadd.s32 1, %s9
    $region7: #{idwt_2d.1} parent=1 // loop_footer_branch
      %8 = sbr.rel target = $region3
    $region8: #{idwt_2d.1} parent=1 // loop_exit
      _
    %1446 = vsyncpa [#allocation3], 1
    %s1447 = scalar_lea.sflag [#allocation3], 1
    %1448 = vsyncpa %s1447, 1

</llo_original>
